<compile_context>
chip_gen: v7x
topology: tpu7x:2x2x1
jax: 0.10.0
libtpu: 0.0.40
codegen_flags: <defaults>
</compile_context>

<pallas_src>
import jax
import jax.numpy as jnp
from jax.experimental import pallas as pl
from jax.experimental.pallas import tpu as pltpu

CIN, COUT = 4, 6


def convt_kernel(w_ref, b_ref, x_ref, o_ref):
    # w_ref: (CIN, COUT) f32 in SMEM   (torch weight[:, :, 0, 0])
    # b_ref: (COUT,)     f32 in SMEM
    # x_ref: (N*CIN, H*W) f32 in VMEM  (NCHW flattened, lane dim = H*W)
    # o_ref: (N*COUT, H*W) f32 in VMEM (even-width output slab, NCHW layout)
    cin, cout = w_ref.shape
    nc, hw = x_ref.shape
    n_batch = nc // cin

    for n in range(n_batch):
        # Load the CIN input rows for this batch element once (full lane width).
        x_rows = [x_ref[pl.ds(n * cin + ci, 1), :] for ci in range(cin)]
        for co in range(cout):
            # out[n, co, :] = sum_ci w[ci, co] * x[n, ci, :] + b[co]
            acc = w_ref[0, co] * x_rows[0]
            for ci in range(1, cin):
                acc = acc + w_ref[ci, co] * x_rows[ci]
            o_ref[pl.ds(n * cout + co, 1), :] = acc + b_ref[co]


def conv_transpose2d(x_nchw, weight, bias):
    N, C, H, W = x_nchw.shape
    assert C == CIN
    HW = H * W

    # Pure reshapes only -- no data-moving transposes around the kernel.
    x2d = x_nchw.reshape(N * CIN, HW)        # NCHW row-major flatten
    w2d = weight.reshape(CIN, COUT)          # torch weight is (Cin, Cout, 1, 1)
    b1d = bias.reshape(COUT)

    even = pl.pallas_call(
        convt_kernel,
        out_shape=jax.ShapeDtypeStruct((N * COUT, HW), x_nchw.dtype),
        in_specs=[
            pl.BlockSpec(memory_space=pltpu.MemorySpace.SMEM),   # weight scalars
            pl.BlockSpec(memory_space=pltpu.MemorySpace.SMEM),   # bias scalars
            pl.BlockSpec(memory_space=pltpu.MemorySpace.VMEM),   # x (whole array)
        ],
        out_specs=pl.BlockSpec(memory_space=pltpu.MemorySpace.VMEM),
    )(w2d, b1d, x2d)

    # Assemble the final NCHW output: even width positions = kernel result,
    # odd width positions (zero-insertion gaps + output_padding) = bias only.
    even = even.reshape(N, COUT, H, W)
    odd = jnp.broadcast_to(bias.reshape(1, COUT, 1, 1),
                           (N, COUT, H, W)).astype(even.dtype)
    W_out = 2 * W   # (W-1)*2 + 1 + output_padding(1)
    y = jnp.stack([even, odd], axis=-1).reshape(N, COUT, H, W_out)
    return y


def reference(x_nchw, weight, bias):
    # Plain-JAX reference of the same transposed conv.
    N, C, H, W = x_nchw.shape
    w2d = weight.reshape(CIN, COUT)
    even = jnp.einsum("nchw,co->nohw", x_nchw, w2d) + bias[None, :, None, None]
    W_out = 2 * W
    out = jnp.broadcast_to(bias[None, :, None, None],
                           (N, COUT, H, W_out)).astype(x_nchw.dtype)
    out = out.at[:, :, :, 0::2].set(even.astype(x_nchw.dtype))
    return out


if __name__ == "__main__":
    key = jax.random.PRNGKey(0)
    kx, kw, kb = jax.random.split(key, 3)

    # Input consistent with the module: NCHW, small shape.
    x = jax.random.normal(kx, (2, CIN, 16, 16), dtype=jnp.float32)

    # Deterministic synthetic parameters (torch ConvTranspose2d shapes:
    # weight (Cin, Cout, 1, 1), bias (Cout,)).
    weight = jax.random.normal(kw, (CIN, COUT, 1, 1), dtype=jnp.float32) * 0.1
    bias = jax.random.normal(kb, (COUT,), dtype=jnp.float32) * 0.1

    y = conv_transpose2d(x, weight, bias)
    y = jax.block_until_ready(y)

    y_ref = reference(x, weight, bias)
    assert y.shape == (2, COUT, 16, 32), y.shape
    assert jnp.allclose(y, y_ref, atol=1e-5, rtol=1e-5)

    print("KERNEL_OK")
</pallas_src>

<mosaic_0001>
module attributes {stable_mosaic.version = 11 : i64} {
  func.func @convt_kernel(%arg0: memref<4x6xf32, #tpu.memory_space<smem>>, %arg1: memref<6xf32, #tpu.memory_space<smem>>, %arg2: memref<8x256xf32, #tpu.memory_space<vmem>>, %arg3: memref<12x256xf32, #tpu.memory_space<vmem>>) attributes {dimension_semantics = [], scalar_prefetch = 0 : i64, scratch_operands = 0 : i64, tpu.core_type = #tpu.core_type<tc>} {
    %c0 = arith.constant 0 : index
    %c0_0 = arith.constant 0 : index
    %0 = vector.load %arg2[%c0, %c0_0] : memref<8x256xf32, #tpu.memory_space<vmem>>, vector<1x256xf32>
    %c1 = arith.constant 1 : index
    %c0_1 = arith.constant 0 : index
    %1 = vector.load %arg2[%c1, %c0_1] : memref<8x256xf32, #tpu.memory_space<vmem>>, vector<1x256xf32>
    %c2 = arith.constant 2 : index
    %c0_2 = arith.constant 0 : index
    %2 = vector.load %arg2[%c2, %c0_2] : memref<8x256xf32, #tpu.memory_space<vmem>>, vector<1x256xf32>
    %c3 = arith.constant 3 : index
    %c0_3 = arith.constant 0 : index
    %3 = vector.load %arg2[%c3, %c0_3] : memref<8x256xf32, #tpu.memory_space<vmem>>, vector<1x256xf32>
    %c0_4 = arith.constant 0 : index
    %c0_5 = arith.constant 0 : index
    %4 = memref.load %arg0[%c0_4, %c0_5] : memref<4x6xf32, #tpu.memory_space<smem>>
    %5 = vector.broadcast %4 : f32 to vector<1x256xf32>
    %6 = arith.mulf %5, %0 : vector<1x256xf32>
    %c1_6 = arith.constant 1 : index
    %c0_7 = arith.constant 0 : index
    %7 = memref.load %arg0[%c1_6, %c0_7] : memref<4x6xf32, #tpu.memory_space<smem>>
    %8 = vector.broadcast %7 : f32 to vector<1x256xf32>
    %9 = arith.mulf %8, %1 : vector<1x256xf32>
    %10 = arith.addf %6, %9 : vector<1x256xf32>
    %c2_8 = arith.constant 2 : index
    %c0_9 = arith.constant 0 : index
    %11 = memref.load %arg0[%c2_8, %c0_9] : memref<4x6xf32, #tpu.memory_space<smem>>
    %12 = vector.broadcast %11 : f32 to vector<1x256xf32>
    %13 = arith.mulf %12, %2 : vector<1x256xf32>
    %14 = arith.addf %10, %13 : vector<1x256xf32>
    %c3_10 = arith.constant 3 : index
    %c0_11 = arith.constant 0 : index
    %15 = memref.load %arg0[%c3_10, %c0_11] : memref<4x6xf32, #tpu.memory_space<smem>>
    %16 = vector.broadcast %15 : f32 to vector<1x256xf32>
    %17 = arith.mulf %16, %3 : vector<1x256xf32>
    %18 = arith.addf %14, %17 : vector<1x256xf32>
    %c0_12 = arith.constant 0 : index
    %19 = memref.load %arg1[%c0_12] : memref<6xf32, #tpu.memory_space<smem>>
    %20 = vector.broadcast %19 : f32 to vector<1x256xf32>
    %21 = arith.addf %18, %20 : vector<1x256xf32>
    %c0_13 = arith.constant 0 : index
    %c0_14 = arith.constant 0 : index
    %22 = vector.load %arg3[%c0_13, %c0_14] : memref<12x256xf32, #tpu.memory_space<vmem>>, vector<1x256xf32>
    tpu.vector_store %arg3[%c0_13, %c0_14], %21 {strides = array<i32>} : memref<12x256xf32, #tpu.memory_space<vmem>>, vector<1x256xf32>,
    %c0_15 = arith.constant 0 : index
    %c1_16 = arith.constant 1 : index
    %23 = memref.load %arg0[%c0_15, %c1_16] : memref<4x6xf32, #tpu.memory_space<smem>>
    %24 = vector.broadcast %23 : f32 to vector<1x256xf32>
    %25 = arith.mulf %24, %0 : vector<1x256xf32>
    %c1_17 = arith.constant 1 : index
    %c1_18 = arith.constant 1 : index
    %26 = memref.load %arg0[%c1_17, %c1_18] : memref<4x6xf32, #tpu.memory_space<smem>>
    %27 = vector.broadcast %26 : f32 to vector<1x256xf32>
    %28 = arith.mulf %27, %1 : vector<1x256xf32>
    %29 = arith.addf %25, %28 : vector<1x256xf32>
    %c2_19 = arith.constant 2 : index
    %c1_20 = arith.constant 1 : index
    %30 = memref.load %arg0[%c2_19, %c1_20] : memref<4x6xf32, #tpu.memory_space<smem>>
    %31 = vector.broadcast %30 : f32 to vector<1x256xf32>
    %32 = arith.mulf %31, %2 : vector<1x256xf32>
    %33 = arith.addf %29, %32 : vector<1x256xf32>
    %c3_21 = arith.constant 3 : index
    %c1_22 = arith.constant 1 : index
    %34 = memref.load %arg0[%c3_21, %c1_22] : memref<4x6xf32, #tpu.memory_space<smem>>
    %35 = vector.broadcast %34 : f32 to vector<1x256xf32>
    %36 = arith.mulf %35, %3 : vector<1x256xf32>
    %37 = arith.addf %33, %36 : vector<1x256xf32>
    %c1_23 = arith.constant 1 : index
    %38 = memref.load %arg1[%c1_23] : memref<6xf32, #tpu.memory_space<smem>>
    %39 = vector.broadcast %38 : f32 to vector<1x256xf32>
    %40 = arith.addf %37, %39 : vector<1x256xf32>
    %c1_24 = arith.constant 1 : index
    %c0_25 = arith.constant 0 : index
    %41 = vector.load %arg3[%c1_24, %c0_25] : memref<12x256xf32, #tpu.memory_space<vmem>>, vector<1x256xf32>
    tpu.vector_store %arg3[%c1_24, %c0_25], %40 {strides = array<i32>} : memref<12x256xf32, #tpu.memory_space<vmem>>, vector<1x256xf32>,
    %c0_26 = arith.constant 0 : index
    %c2_27 = arith.constant 2 : index
    %42 = memref.load %arg0[%c0_26, %c2_27] : memref<4x6xf32, #tpu.memory_space<smem>>
    %43 = vector.broadcast %42 : f32 to vector<1x256xf32>
    %44 = arith.mulf %43, %0 : vector<1x256xf32>
    %c1_28 = arith.constant 1 : index
    %c2_29 = arith.constant 2 : index
    %45 = memref.load %arg0[%c1_28, %c2_29] : memref<4x6xf32, #tpu.memory_space<smem>>
    %46 = vector.broadcast %45 : f32 to vector<1x256xf32>
    %47 = arith.mulf %46, %1 : vector<1x256xf32>
    %48 = arith.addf %44, %47 : vector<1x256xf32>
    %c2_30 = arith.constant 2 : index
    %c2_31 = arith.constant 2 : index
    %49 = memref.load %arg0[%c2_30, %c2_31] : memref<4x6xf32, #tpu.memory_space<smem>>
    %50 = vector.broadcast %49 : f32 to vector<1x256xf32>
    %51 = arith.mulf %50, %2 : vector<1x256xf32>
    %52 = arith.addf %48, %51 : vector<1x256xf32>
    %c3_32 = arith.constant 3 : index
    %c2_33 = arith.constant 2 : index
    %53 = memref.load %arg0[%c3_32, %c2_33] : memref<4x6xf32, #tpu.memory_space<smem>>
    %54 = vector.broadcast %53 : f32 to vector<1x256xf32>
    %55 = arith.mulf %54, %3 : vector<1x256xf32>
    %56 = arith.addf %52, %55 : vector<1x256xf32>
    %c2_34 = arith.constant 2 : index
    %57 = memref.load %arg1[%c2_34] : memref<6xf32, #tpu.memory_space<smem>>
    %58 = vector.broadcast %57 : f32 to vector<1x256xf32>
    %59 = arith.addf %56, %58 : vector<1x256xf32>
    %c2_35 = arith.constant 2 : index
    %c0_36 = arith.constant 0 : index
    %60 = vector.load %arg3[%c2_35, %c0_36] : memref<12x256xf32, #tpu.memory_space<vmem>>, vector<1x256xf32>
    tpu.vector_store %arg3[%c2_35, %c0_36], %59 {strides = array<i32>} : memref<12x256xf32, #tpu.memory_space<vmem>>, vector<1x256xf32>,
    %c0_37 = arith.constant 0 : index
    %c3_38 = arith.constant 3 : index
    %61 = memref.load %arg0[%c0_37, %c3_38] : memref<4x6xf32, #tpu.memory_space<smem>>
    %62 = vector.broadcast %61 : f32 to vector<1x256xf32>
    %63 = arith.mulf %62, %0 : vector<1x256xf32>
    %c1_39 = arith.constant 1 : index
    %c3_40 = arith.constant 3 : index
    %64 = memref.load %arg0[%c1_39, %c3_40] : memref<4x6xf32, #tpu.memory_space<smem>>
    %65 = vector.broadcast %64 : f32 to vector<1x256xf32>
    %66 = arith.mulf %65, %1 : vector<1x256xf32>
    %67 = arith.addf %63, %66 : vector<1x256xf32>
    %c2_41 = arith.constant 2 : index
    %c3_42 = arith.constant 3 : index
    %68 = memref.load %arg0[%c2_41, %c3_42] : memref<4x6xf32, #tpu.memory_space<smem>>
    %69 = vector.broadcast %68 : f32 to vector<1x256xf32>
    %70 = arith.mulf %69, %2 : vector<1x256xf32>
    %71 = arith.addf %67, %70 : vector<1x256xf32>
    %c3_43 = arith.constant 3 : index
    %c3_44 = arith.constant 3 : index
    %72 = memref.load %arg0[%c3_43, %c3_44] : memref<4x6xf32, #tpu.memory_space<smem>>
    %73 = vector.broadcast %72 : f32 to vector<1x256xf32>
    %74 = arith.mulf %73, %3 : vector<1x256xf32>
    %75 = arith.addf %71, %74 : vector<1x256xf32>
    %c3_45 = arith.constant 3 : index
    %76 = memref.load %arg1[%c3_45] : memref<6xf32, #tpu.memory_space<smem>>
    %77 = vector.broadcast %76 : f32 to vector<1x256xf32>
    %78 = arith.addf %75, %77 : vector<1x256xf32>
    %c3_46 = arith.constant 3 : index
    %c0_47 = arith.constant 0 : index
    %79 = vector.load %arg3[%c3_46, %c0_47] : memref<12x256xf32, #tpu.memory_space<vmem>>, vector<1x256xf32>
    tpu.vector_store %arg3[%c3_46, %c0_47], %78 {strides = array<i32>} : memref<12x256xf32, #tpu.memory_space<vmem>>, vector<1x256xf32>,
    %c0_48 = arith.constant 0 : index
    %c4 = arith.constant 4 : index
    %80 = memref.load %arg0[%c0_48, %c4] : memref<4x6xf32, #tpu.memory_space<smem>>
    %81 = vector.broadcast %80 : f32 to vector<1x256xf32>
    %82 = arith.mulf %81, %0 : vector<1x256xf32>
    %c1_49 = arith.constant 1 : index
    %c4_50 = arith.constant 4 : index
    %83 = memref.load %arg0[%c1_49, %c4_50] : memref<4x6xf32, #tpu.memory_space<smem>>
    %84 = vector.broadcast %83 : f32 to vector<1x256xf32>
    %85 = arith.mulf %84, %1 : vector<1x256xf32>
    %86 = arith.addf %82, %85 : vector<1x256xf32>
    %c2_51 = arith.constant 2 : index
    %c4_52 = arith.constant 4 : index
    %87 = memref.load %arg0[%c2_51, %c4_52] : memref<4x6xf32, #tpu.memory_space<smem>>
    %88 = vector.broadcast %87 : f32 to vector<1x256xf32>
    %89 = arith.mulf %88, %2 : vector<1x256xf32>
    %90 = arith.addf %86, %89 : vector<1x256xf32>
    %c3_53 = arith.constant 3 : index
    %c4_54 = arith.constant 4 : index
    %91 = memref.load %arg0[%c3_53, %c4_54] : memref<4x6xf32, #tpu.memory_space<smem>>
    %92 = vector.broadcast %91 : f32 to vector<1x256xf32>
    %93 = arith.mulf %92, %3 : vector<1x256xf32>
    %94 = arith.addf %90, %93 : vector<1x256xf32>
    %c4_55 = arith.constant 4 : index
    %95 = memref.load %arg1[%c4_55] : memref<6xf32, #tpu.memory_space<smem>>
    %96 = vector.broadcast %95 : f32 to vector<1x256xf32>
    %97 = arith.addf %94, %96 : vector<1x256xf32>
    %c4_56 = arith.constant 4 : index
    %c0_57 = arith.constant 0 : index
    %98 = vector.load %arg3[%c4_56, %c0_57] : memref<12x256xf32, #tpu.memory_space<vmem>>, vector<1x256xf32>
    tpu.vector_store %arg3[%c4_56, %c0_57], %97 {strides = array<i32>} : memref<12x256xf32, #tpu.memory_space<vmem>>, vector<1x256xf32>,
    %c0_58 = arith.constant 0 : index
    %c5 = arith.constant 5 : index
    %99 = memref.load %arg0[%c0_58, %c5] : memref<4x6xf32, #tpu.memory_space<smem>>
    %100 = vector.broadcast %99 : f32 to vector<1x256xf32>
    %101 = arith.mulf %100, %0 : vector<1x256xf32>
    %c1_59 = arith.constant 1 : index
    %c5_60 = arith.constant 5 : index
    %102 = memref.load %arg0[%c1_59, %c5_60] : memref<4x6xf32, #tpu.memory_space<smem>>
    %103 = vector.broadcast %102 : f32 to vector<1x256xf32>
    %104 = arith.mulf %103, %1 : vector<1x256xf32>
    %105 = arith.addf %101, %104 : vector<1x256xf32>
    %c2_61 = arith.constant 2 : index
    %c5_62 = arith.constant 5 : index
    %106 = memref.load %arg0[%c2_61, %c5_62] : memref<4x6xf32, #tpu.memory_space<smem>>
    %107 = vector.broadcast %106 : f32 to vector<1x256xf32>
    %108 = arith.mulf %107, %2 : vector<1x256xf32>
    %109 = arith.addf %105, %108 : vector<1x256xf32>
    %c3_63 = arith.constant 3 : index
    %c5_64 = arith.constant 5 : index
    %110 = memref.load %arg0[%c3_63, %c5_64] : memref<4x6xf32, #tpu.memory_space<smem>>
    %111 = vector.broadcast %110 : f32 to vector<1x256xf32>
    %112 = arith.mulf %111, %3 : vector<1x256xf32>
    %113 = arith.addf %109, %112 : vector<1x256xf32>
    %c5_65 = arith.constant 5 : index
    %114 = memref.load %arg1[%c5_65] : memref<6xf32, #tpu.memory_space<smem>>
    %115 = vector.broadcast %114 : f32 to vector<1x256xf32>
    %116 = arith.addf %113, %115 : vector<1x256xf32>
    %c5_66 = arith.constant 5 : index
    %c0_67 = arith.constant 0 : index
    %117 = vector.load %arg3[%c5_66, %c0_67] : memref<12x256xf32, #tpu.memory_space<vmem>>, vector<1x256xf32>
    tpu.vector_store %arg3[%c5_66, %c0_67], %116 {strides = array<i32>} : memref<12x256xf32, #tpu.memory_space<vmem>>, vector<1x256xf32>,
    %c4_68 = arith.constant 4 : index
    %c0_69 = arith.constant 0 : index
    %118 = vector.load %arg2[%c4_68, %c0_69] : memref<8x256xf32, #tpu.memory_space<vmem>>, vector<1x256xf32>
    %c5_70 = arith.constant 5 : index
    %c0_71 = arith.constant 0 : index
    %119 = vector.load %arg2[%c5_70, %c0_71] : memref<8x256xf32, #tpu.memory_space<vmem>>, vector<1x256xf32>
    %c6 = arith.constant 6 : index
    %c0_72 = arith.constant 0 : index
    %120 = vector.load %arg2[%c6, %c0_72] : memref<8x256xf32, #tpu.memory_space<vmem>>, vector<1x256xf32>
    %c7 = arith.constant 7 : index
    %c0_73 = arith.constant 0 : index
    %121 = vector.load %arg2[%c7, %c0_73] : memref<8x256xf32, #tpu.memory_space<vmem>>, vector<1x256xf32>
    %c0_74 = arith.constant 0 : index
    %c0_75 = arith.constant 0 : index
    %122 = memref.load %arg0[%c0_74, %c0_75] : memref<4x6xf32, #tpu.memory_space<smem>>
    %123 = vector.broadcast %122 : f32 to vector<1x256xf32>
    %124 = arith.mulf %123, %118 : vector<1x256xf32>
    %c1_76 = arith.constant 1 : index
    %c0_77 = arith.constant 0 : index
    %125 = memref.load %arg0[%c1_76, %c0_77] : memref<4x6xf32, #tpu.memory_space<smem>>
    %126 = vector.broadcast %125 : f32 to vector<1x256xf32>
    %127 = arith.mulf %126, %119 : vector<1x256xf32>
    %128 = arith.addf %124, %127 : vector<1x256xf32>
    %c2_78 = arith.constant 2 : index
    %c0_79 = arith.constant 0 : index
    %129 = memref.load %arg0[%c2_78, %c0_79] : memref<4x6xf32, #tpu.memory_space<smem>>
    %130 = vector.broadcast %129 : f32 to vector<1x256xf32>
    %131 = arith.mulf %130, %120 : vector<1x256xf32>
    %132 = arith.addf %128, %131 : vector<1x256xf32>
    %c3_80 = arith.constant 3 : index
    %c0_81 = arith.constant 0 : index
    %133 = memref.load %arg0[%c3_80, %c0_81] : memref<4x6xf32, #tpu.memory_space<smem>>
    %134 = vector.broadcast %133 : f32 to vector<1x256xf32>
    %135 = arith.mulf %134, %121 : vector<1x256xf32>
    %136 = arith.addf %132, %135 : vector<1x256xf32>
    %c0_82 = arith.constant 0 : index
    %137 = memref.load %arg1[%c0_82] : memref<6xf32, #tpu.memory_space<smem>>
    %138 = vector.broadcast %137 : f32 to vector<1x256xf32>
    %139 = arith.addf %136, %138 : vector<1x256xf32>
    %c6_83 = arith.constant 6 : index
    %c0_84 = arith.constant 0 : index
    %140 = vector.load %arg3[%c6_83, %c0_84] : memref<12x256xf32, #tpu.memory_space<vmem>>, vector<1x256xf32>
    tpu.vector_store %arg3[%c6_83, %c0_84], %139 {strides = array<i32>} : memref<12x256xf32, #tpu.memory_space<vmem>>, vector<1x256xf32>,
    %c0_85 = arith.constant 0 : index
    %c1_86 = arith.constant 1 : index
    %141 = memref.load %arg0[%c0_85, %c1_86] : memref<4x6xf32, #tpu.memory_space<smem>>
    %142 = vector.broadcast %141 : f32 to vector<1x256xf32>
    %143 = arith.mulf %142, %118 : vector<1x256xf32>
    %c1_87 = arith.constant 1 : index
    %c1_88 = arith.constant 1 : index
    %144 = memref.load %arg0[%c1_87, %c1_88] : memref<4x6xf32, #tpu.memory_space<smem>>
    %145 = vector.broadcast %144 : f32 to vector<1x256xf32>
    %146 = arith.mulf %145, %119 : vector<1x256xf32>
    %147 = arith.addf %143, %146 : vector<1x256xf32>
    %c2_89 = arith.constant 2 : index
    %c1_90 = arith.constant 1 : index
    %148 = memref.load %arg0[%c2_89, %c1_90] : memref<4x6xf32, #tpu.memory_space<smem>>
    %149 = vector.broadcast %148 : f32 to vector<1x256xf32>
    %150 = arith.mulf %149, %120 : vector<1x256xf32>
    %151 = arith.addf %147, %150 : vector<1x256xf32>
    %c3_91 = arith.constant 3 : index
    %c1_92 = arith.constant 1 : index
    %152 = memref.load %arg0[%c3_91, %c1_92] : memref<4x6xf32, #tpu.memory_space<smem>>
    %153 = vector.broadcast %152 : f32 to vector<1x256xf32>
    %154 = arith.mulf %153, %121 : vector<1x256xf32>
    %155 = arith.addf %151, %154 : vector<1x256xf32>
    %c1_93 = arith.constant 1 : index
    %156 = memref.load %arg1[%c1_93] : memref<6xf32, #tpu.memory_space<smem>>
    %157 = vector.broadcast %156 : f32 to vector<1x256xf32>
    %158 = arith.addf %155, %157 : vector<1x256xf32>
    %c7_94 = arith.constant 7 : index
    %c0_95 = arith.constant 0 : index
    %159 = vector.load %arg3[%c7_94, %c0_95] : memref<12x256xf32, #tpu.memory_space<vmem>>, vector<1x256xf32>
    tpu.vector_store %arg3[%c7_94, %c0_95], %158 {strides = array<i32>} : memref<12x256xf32, #tpu.memory_space<vmem>>, vector<1x256xf32>,
    %c0_96 = arith.constant 0 : index
    %c2_97 = arith.constant 2 : index
    %160 = memref.load %arg0[%c0_96, %c2_97] : memref<4x6xf32, #tpu.memory_space<smem>>
    %161 = vector.broadcast %160 : f32 to vector<1x256xf32>
    %162 = arith.mulf %161, %118 : vector<1x256xf32>
    %c1_98 = arith.constant 1 : index
    %c2_99 = arith.constant 2 : index
    %163 = memref.load %arg0[%c1_98, %c2_99] : memref<4x6xf32, #tpu.memory_space<smem>>
    %164 = vector.broadcast %163 : f32 to vector<1x256xf32>
    %165 = arith.mulf %164, %119 : vector<1x256xf32>
    %166 = arith.addf %162, %165 : vector<1x256xf32>
    %c2_100 = arith.constant 2 : index
    %c2_101 = arith.constant 2 : index
    %167 = memref.load %arg0[%c2_100, %c2_101] : memref<4x6xf32, #tpu.memory_space<smem>>
    %168 = vector.broadcast %167 : f32 to vector<1x256xf32>
    %169 = arith.mulf %168, %120 : vector<1x256xf32>
    %170 = arith.addf %166, %169 : vector<1x256xf32>
    %c3_102 = arith.constant 3 : index
    %c2_103 = arith.constant 2 : index
    %171 = memref.load %arg0[%c3_102, %c2_103] : memref<4x6xf32, #tpu.memory_space<smem>>
    %172 = vector.broadcast %171 : f32 to vector<1x256xf32>
    %173 = arith.mulf %172, %121 : vector<1x256xf32>
    %174 = arith.addf %170, %173 : vector<1x256xf32>
    %c2_104 = arith.constant 2 : index
    %175 = memref.load %arg1[%c2_104] : memref<6xf32, #tpu.memory_space<smem>>
    %176 = vector.broadcast %175 : f32 to vector<1x256xf32>
    %177 = arith.addf %174, %176 : vector<1x256xf32>
    %c8 = arith.constant 8 : index
    %c0_105 = arith.constant 0 : index
    %178 = vector.load %arg3[%c8, %c0_105] : memref<12x256xf32, #tpu.memory_space<vmem>>, vector<1x256xf32>
    tpu.vector_store %arg3[%c8, %c0_105], %177 {strides = array<i32>} : memref<12x256xf32, #tpu.memory_space<vmem>>, vector<1x256xf32>,
    %c0_106 = arith.constant 0 : index
    %c3_107 = arith.constant 3 : index
    %179 = memref.load %arg0[%c0_106, %c3_107] : memref<4x6xf32, #tpu.memory_space<smem>>
    %180 = vector.broadcast %179 : f32 to vector<1x256xf32>
    %181 = arith.mulf %180, %118 : vector<1x256xf32>
    %c1_108 = arith.constant 1 : index
    %c3_109 = arith.constant 3 : index
    %182 = memref.load %arg0[%c1_108, %c3_109] : memref<4x6xf32, #tpu.memory_space<smem>>
    %183 = vector.broadcast %182 : f32 to vector<1x256xf32>
    %184 = arith.mulf %183, %119 : vector<1x256xf32>
    %185 = arith.addf %181, %184 : vector<1x256xf32>
    %c2_110 = arith.constant 2 : index
    %c3_111 = arith.constant 3 : index
    %186 = memref.load %arg0[%c2_110, %c3_111] : memref<4x6xf32, #tpu.memory_space<smem>>
    %187 = vector.broadcast %186 : f32 to vector<1x256xf32>
    %188 = arith.mulf %187, %120 : vector<1x256xf32>
    %189 = arith.addf %185, %188 : vector<1x256xf32>
    %c3_112 = arith.constant 3 : index
    %c3_113 = arith.constant 3 : index
    %190 = memref.load %arg0[%c3_112, %c3_113] : memref<4x6xf32, #tpu.memory_space<smem>>
    %191 = vector.broadcast %190 : f32 to vector<1x256xf32>
    %192 = arith.mulf %191, %121 : vector<1x256xf32>
    %193 = arith.addf %189, %192 : vector<1x256xf32>
    %c3_114 = arith.constant 3 : index
    %194 = memref.load %arg1[%c3_114] : memref<6xf32, #tpu.memory_space<smem>>
    %195 = vector.broadcast %194 : f32 to vector<1x256xf32>
    %196 = arith.addf %193, %195 : vector<1x256xf32>
    %c9 = arith.constant 9 : index
    %c0_115 = arith.constant 0 : index
    %197 = vector.load %arg3[%c9, %c0_115] : memref<12x256xf32, #tpu.memory_space<vmem>>, vector<1x256xf32>
    tpu.vector_store %arg3[%c9, %c0_115], %196 {strides = array<i32>} : memref<12x256xf32, #tpu.memory_space<vmem>>, vector<1x256xf32>,
    %c0_116 = arith.constant 0 : index
    %c4_117 = arith.constant 4 : index
    %198 = memref.load %arg0[%c0_116, %c4_117] : memref<4x6xf32, #tpu.memory_space<smem>>
    %199 = vector.broadcast %198 : f32 to vector<1x256xf32>
    %200 = arith.mulf %199, %118 : vector<1x256xf32>
    %c1_118 = arith.constant 1 : index
    %c4_119 = arith.constant 4 : index
    %201 = memref.load %arg0[%c1_118, %c4_119] : memref<4x6xf32, #tpu.memory_space<smem>>
    %202 = vector.broadcast %201 : f32 to vector<1x256xf32>
    %203 = arith.mulf %202, %119 : vector<1x256xf32>
    %204 = arith.addf %200, %203 : vector<1x256xf32>
    %c2_120 = arith.constant 2 : index
    %c4_121 = arith.constant 4 : index
    %205 = memref.load %arg0[%c2_120, %c4_121] : memref<4x6xf32, #tpu.memory_space<smem>>
    %206 = vector.broadcast %205 : f32 to vector<1x256xf32>
    %207 = arith.mulf %206, %120 : vector<1x256xf32>
    %208 = arith.addf %204, %207 : vector<1x256xf32>
    %c3_122 = arith.constant 3 : index
    %c4_123 = arith.constant 4 : index
    %209 = memref.load %arg0[%c3_122, %c4_123] : memref<4x6xf32, #tpu.memory_space<smem>>
    %210 = vector.broadcast %209 : f32 to vector<1x256xf32>
    %211 = arith.mulf %210, %121 : vector<1x256xf32>
    %212 = arith.addf %208, %211 : vector<1x256xf32>
    %c4_124 = arith.constant 4 : index
    %213 = memref.load %arg1[%c4_124] : memref<6xf32, #tpu.memory_space<smem>>
    %214 = vector.broadcast %213 : f32 to vector<1x256xf32>
    %215 = arith.addf %212, %214 : vector<1x256xf32>
    %c10 = arith.constant 10 : index
    %c0_125 = arith.constant 0 : index
    %216 = vector.load %arg3[%c10, %c0_125] : memref<12x256xf32, #tpu.memory_space<vmem>>, vector<1x256xf32>
    tpu.vector_store %arg3[%c10, %c0_125], %215 {strides = array<i32>} : memref<12x256xf32, #tpu.memory_space<vmem>>, vector<1x256xf32>,
    %c0_126 = arith.constant 0 : index
    %c5_127 = arith.constant 5 : index
    %217 = memref.load %arg0[%c0_126, %c5_127] : memref<4x6xf32, #tpu.memory_space<smem>>
    %218 = vector.broadcast %217 : f32 to vector<1x256xf32>
    %219 = arith.mulf %218, %118 : vector<1x256xf32>
    %c1_128 = arith.constant 1 : index
    %c5_129 = arith.constant 5 : index
    %220 = memref.load %arg0[%c1_128, %c5_129] : memref<4x6xf32, #tpu.memory_space<smem>>
    %221 = vector.broadcast %220 : f32 to vector<1x256xf32>
    %222 = arith.mulf %221, %119 : vector<1x256xf32>
    %223 = arith.addf %219, %222 : vector<1x256xf32>
    %c2_130 = arith.constant 2 : index
    %c5_131 = arith.constant 5 : index
    %224 = memref.load %arg0[%c2_130, %c5_131] : memref<4x6xf32, #tpu.memory_space<smem>>
    %225 = vector.broadcast %224 : f32 to vector<1x256xf32>
    %226 = arith.mulf %225, %120 : vector<1x256xf32>
    %227 = arith.addf %223, %226 : vector<1x256xf32>
    %c3_132 = arith.constant 3 : index
    %c5_133 = arith.constant 5 : index
    %228 = memref.load %arg0[%c3_132, %c5_133] : memref<4x6xf32, #tpu.memory_space<smem>>
    %229 = vector.broadcast %228 : f32 to vector<1x256xf32>
    %230 = arith.mulf %229, %121 : vector<1x256xf32>
    %231 = arith.addf %227, %230 : vector<1x256xf32>
    %c5_134 = arith.constant 5 : index
    %232 = memref.load %arg1[%c5_134] : memref<6xf32, #tpu.memory_space<smem>>
    %233 = vector.broadcast %232 : f32 to vector<1x256xf32>
    %234 = arith.addf %231, %233 : vector<1x256xf32>
    %c11 = arith.constant 11 : index
    %c0_135 = arith.constant 0 : index
    %235 = vector.load %arg3[%c11, %c0_135] : memref<12x256xf32, #tpu.memory_space<vmem>>, vector<1x256xf32>
    tpu.vector_store %arg3[%c11, %c0_135], %234 {strides = array<i32>} : memref<12x256xf32, #tpu.memory_space<vmem>>, vector<1x256xf32>,
    return
  }
}

</mosaic_0001>

<llo_original>
// kernel: tpu_custom_call.1
$region0: #{tpu_custom_call.1}
  #allocation0 [shape = 'u32[]', space=smem, size = 0x4, offset = 0x4, fixed_abs, tag = 'smem constant byte address 0x4 - core index']
  #allocation1 [shape = 'u32[144,128]{1,0:T(1,128)}', space=vmem, size = 0x12000, scoped, tag = 'internal scratch']
  %s0 = inlined_call_operand.hbm [shape: f32[4,6], index: 0, kind: input, shape index: {}]
  %s1 = inlined_call_operand.vmem [shape: f32[6], index: 1, kind: input, shape index: {}]
  %s2 = inlined_call_operand.hbm [shape: f32[8,256], index: 2, kind: input, shape index: {}]
  %s3 = inlined_call_operand.hbm [shape: f32[12,256], index: 3, kind: output, shape index: {}]
  %s4 = sld [smem:[#allocation0]]
  $region34: #{tpu_custom_call.1} parent=0
    _
  %s6 = ssub.s32 1, %s4
  %s7 = scalar_select 0, %s6, %s4
  $region1: #{tpu_custom_call.1} parent=0
    #allocation2 [shape = 'u8[2048]{0}', space=smem, size = 0x800, scoped, tag = 'input window, operand 0, single buffered']
    #allocation3 [shape = 's32[1]{0}', space=sflag, size = 0x4, scoped, tag = 'scoped memory for tpu_custom_call.1']
    #allocation4 [shape = 's32[1]{0}', space=sflag, size = 0x4, scoped, tag = 'scoped memory for tpu_custom_call.1']
    #allocation5 [shape = 's32[1]{0}', space=sflag, size = 0x4, scoped, tag = 'scoped memory for tpu_custom_call.1']
    #allocation6 [shape = 's32[1]{0}', space=sflag, size = 0x4, scoped, tag = 'scoped memory for tpu_custom_call.1']
    #allocation7 [shape = 'u8[512]{0}', space=smem, size = 0x200, scoped, tag = 'input window, operand 1, single buffered']
    #allocation8 [shape = 'u8[8192]{0}', space=vmem, size = 0x2000, scoped, tag = 'input window, operand 2, single buffered']
    #allocation9 [shape = 'u8[16384]{0}', space=vmem, size = 0x4000, scoped, tag = 'output window, operand 0, single buffered']
    %8 = vsyncpa [#allocation5], 0
    %9 = vsyncpa [#allocation6], 0
    %10 = vsyncpa [#allocation3], 0
    %11 = vsyncpa [#allocation4], 0
    // Predicated region
    $region2: #{tpu_custom_call.1} parent=1 // pred_check
      _
    $region3: #{tpu_custom_call.1} parent=1 // pred_check_branch
      %13 = sbr.rel (0) target = $region5
    $region4: #{tpu_custom_call.1} parent=1 // pred_region
      %s15 = ssub.s32 64, 64
      %16 = vsyncadd [#allocation5], %s15
      %19 = dma.hbm_to_smem %s0, 64, [#allocation2], [#allocation5]
    $region5: #{tpu_custom_call.1} parent=1 // pred_fallthru
      _
    // Predicated region
    $region6: #{tpu_custom_call.1} parent=1 // pred_check
      _
    $region7: #{tpu_custom_call.1} parent=1 // pred_check_branch
      %21 = sbr.rel (0) target = $region9
    $region8: #{tpu_custom_call.1} parent=1 // pred_region
      %s23 = ssub.s32 16, 16
      %24 = vsyncadd [#allocation6], %s23
      %s26 = sshll.u32 %s1, 4
      %s27 = int_to_ptr.vmem [resolvable:$true] %s26
      %29 = dma.vmem_to_smem %s27, 16, [#allocation7], [#allocation6]
    $region9: #{tpu_custom_call.1} parent=1 // pred_fallthru
      _
    // Predicated region
    $region10: #{tpu_custom_call.1} parent=1 // pred_check
      _
    $region11: #{tpu_custom_call.1} parent=1 // pred_check_branch
      %31 = sbr.rel (0) target = $region13
    $region12: #{tpu_custom_call.1} parent=1 // pred_region
      %s33 = ssub.s32 256, 256
      %34 = vsyncadd [#allocation3], %s33
      %s36 = sshll.u32 [#allocation8], 4
      %s37 = int_to_ptr.vmem [resolvable:$true] %s36
      %39 = dma.hbm_to_vmem [thread:$0]  %s2, 256, %s37, [#allocation3]
    $region13: #{tpu_custom_call.1} parent=1 // pred_fallthru
      _
    // Predicated region
    $region14: #{tpu_custom_call.1} parent=1 // pred_check
      _
    $region15: #{tpu_custom_call.1} parent=1 // pred_check_branch
      %41 = sbr.rel (0) target = $region17
    $region16: #{tpu_custom_call.1} parent=1 // pred_region
      %42 = dma.done [#allocation5], 64
    $region17: #{tpu_custom_call.1} parent=1 // pred_fallthru
      _
    // Predicated region
    $region18: #{tpu_custom_call.1} parent=1 // pred_check
      _
    $region19: #{tpu_custom_call.1} parent=1 // pred_check_branch
      %44 = sbr.rel (0) target = $region21
    $region20: #{tpu_custom_call.1} parent=1 // pred_region
      %45 = dma.done [#allocation6], 16
    $region21: #{tpu_custom_call.1} parent=1 // pred_fallthru
      _
    // Predicated region
    $region22: #{tpu_custom_call.1} parent=1 // pred_check
      _
    $region23: #{tpu_custom_call.1} parent=1 // pred_check_branch
      %47 = sbr.rel (0) target = $region25
    $region24: #{tpu_custom_call.1} parent=1 // pred_region
      %48 = dma.done [#allocation3], 256
    $region25: #{tpu_custom_call.1} parent=1 // pred_fallthru
      _
    %49 = sfence
    %v50 = vld [vmem:[#allocation8] ss:$8 sm:$0x3]
    %s51 = scalar_lea.vmem [#allocation8], 1
    %v52 = vld [vmem:[%s51] ss:$8 sm:$0x3]
    %s53 = scalar_lea.vmem [#allocation8], 2
    %v54 = vld [vmem:[%s53] ss:$8 sm:$0x3]
    %s55 = scalar_lea.vmem [#allocation8], 3
    %v56 = vld [vmem:[%s55] ss:$8 sm:$0x3]
    %s57 = sld [smem:[#allocation2]]
    %v58 = vstv %s57
    %v59 = vmul.f32 %v58, %v50
    %s60 = sld [smem:[#allocation2 + $0x80]]
    %v61 = vstv %s60
    %v62 = vmul.f32 %v61, %v52
    %v63 = vadd.f32 %v59, %v62
    %s64 = sld [smem:[#allocation2 + $0x100]]
    %v65 = vstv %s64
    %v66 = vmul.f32 %v65, %v54
    %v67 = vadd.f32 %v63, %v66
    %s68 = sld [smem:[#allocation2 + $0x180]]
    %v69 = vstv %s68
    %v70 = vmul.f32 %v69, %v56
    %v71 = vadd.f32 %v67, %v70
    %s72 = sld [smem:[#allocation7]]
    %v73 = vstv %s72
    %v74 = vadd.f32 %v71, %v73
    %v75 = vlaneseq
    %vm76 = vcmp.ge.s32.totalorder %v75, 0
    %vm77 = vcmp.lt.s32.totalorder %v75, 256
    %vm78 = vmand %vm76, %vm77
    %79 = vst.msk [vmem:[#allocation9] ss:$8 sm:$0x3] %vm78, %v74
    %80 = vst.msk [vmem:[#allocation9] ss:$8 sm:$0x0] %vm78, %v74
    %s81 = sld [smem:[#allocation2 + $0x1]]
    %v82 = vstv %s81
    %v83 = vmul.f32 %v82, %v50
    %s84 = sld [smem:[#allocation2 + $0x81]]
    %v85 = vstv %s84
    %v86 = vmul.f32 %v85, %v52
    %v87 = vadd.f32 %v83, %v86
    %s88 = sld [smem:[#allocation2 + $0x101]]
    %v89 = vstv %s88
    %v90 = vmul.f32 %v89, %v54
    %v91 = vadd.f32 %v87, %v90
    %s92 = sld [smem:[#allocation2 + $0x181]]
    %v93 = vstv %s92
    %v94 = vmul.f32 %v93, %v56
    %v95 = vadd.f32 %v91, %v94
    %s96 = sld [smem:[#allocation7 + $0x1]]
    %v97 = vstv %s96
    %v98 = vadd.f32 %v95, %v97
    %s99 = scalar_lea.vmem [#allocation9], 1
    %100 = vst.msk [vmem:[%s99] ss:$8 sm:$0x3] %vm78, %v98
    %101 = vst.msk [vmem:[%s99] ss:$8 sm:$0x0] %vm78, %v98
    %s102 = sld [smem:[#allocation2 + $0x2]]
    %v103 = vstv %s102
    %v104 = vmul.f32 %v103, %v50
    %s105 = sld [smem:[#allocation2 + $0x82]]
    %v106 = vstv %s105
    %v107 = vmul.f32 %v106, %v52
    %v108 = vadd.f32 %v104, %v107
    %s109 = sld [smem:[#allocation2 + $0x102]]
    %v110 = vstv %s109
    %v111 = vmul.f32 %v110, %v54
    %v112 = vadd.f32 %v108, %v111
    %s113 = sld [smem:[#allocation2 + $0x182]]
    %v114 = vstv %s113
    %v115 = vmul.f32 %v114, %v56
    %v116 = vadd.f32 %v112, %v115
    %s117 = sld [smem:[#allocation7 + $0x2]]
    %v118 = vstv %s117
    %v119 = vadd.f32 %v116, %v118
    %s120 = scalar_lea.vmem [#allocation9], 2
    %121 = vst.msk [vmem:[%s120] ss:$8 sm:$0x3] %vm78, %v119
    %122 = vst.msk [vmem:[%s120] ss:$8 sm:$0x0] %vm78, %v119
    %s123 = sld [smem:[#allocation2 + $0x3]]
    %v124 = vstv %s123
    %v125 = vmul.f32 %v124, %v50
    %s126 = sld [smem:[#allocation2 + $0x83]]
    %v127 = vstv %s126
    %v128 = vmul.f32 %v127, %v52
    %v129 = vadd.f32 %v125, %v128
    %s130 = sld [smem:[#allocation2 + $0x103]]
    %v131 = vstv %s130
    %v132 = vmul.f32 %v131, %v54
    %v133 = vadd.f32 %v129, %v132
    %s134 = sld [smem:[#allocation2 + $0x183]]
    %v135 = vstv %s134
    %v136 = vmul.f32 %v135, %v56
    %v137 = vadd.f32 %v133, %v136
    %s138 = sld [smem:[#allocation7 + $0x3]]
    %v139 = vstv %s138
    %v140 = vadd.f32 %v137, %v139
    %s141 = scalar_lea.vmem [#allocation9], 3
    %142 = vst.msk [vmem:[%s141] ss:$8 sm:$0x3] %vm78, %v140
    %143 = vst.msk [vmem:[%s141] ss:$8 sm:$0x0] %vm78, %v140
    %s144 = sld [smem:[#allocation2 + $0x4]]
    %v145 = vstv %s144
    %v146 = vmul.f32 %v145, %v50
    %s147 = sld [smem:[#allocation2 + $0x84]]
    %v148 = vstv %s147
    %v149 = vmul.f32 %v148, %v52
    %v150 = vadd.f32 %v146, %v149
    %s151 = sld [smem:[#allocation2 + $0x104]]
    %v152 = vstv %s151
    %v153 = vmul.f32 %v152, %v54
    %v154 = vadd.f32 %v150, %v153
    %s155 = sld [smem:[#allocation2 + $0x184]]
    %v156 = vstv %s155
    %v157 = vmul.f32 %v156, %v56
    %v158 = vadd.f32 %v154, %v157
    %s159 = sld [smem:[#allocation7 + $0x4]]
    %v160 = vstv %s159
    %v161 = vadd.f32 %v158, %v160
    %s162 = scalar_lea.vmem [#allocation9], 4
    %163 = vst.msk [vmem:[%s162] ss:$8 sm:$0x3] %vm78, %v161
    %164 = vst.msk [vmem:[%s162] ss:$8 sm:$0x0] %vm78, %v161
    %s165 = sld [smem:[#allocation2 + $0x5]]
    %v166 = vstv %s165
    %v167 = vmul.f32 %v166, %v50
    %s168 = sld [smem:[#allocation2 + $0x85]]
    %v169 = vstv %s168
    %v170 = vmul.f32 %v169, %v52
    %v171 = vadd.f32 %v167, %v170
    %s172 = sld [smem:[#allocation2 + $0x105]]
    %v173 = vstv %s172
    %v174 = vmul.f32 %v173, %v54
    %v175 = vadd.f32 %v171, %v174
    %s176 = sld [smem:[#allocation2 + $0x185]]
    %v177 = vstv %s176
    %v178 = vmul.f32 %v177, %v56
    %v179 = vadd.f32 %v175, %v178
    %s180 = sld [smem:[#allocation7 + $0x5]]
    %v181 = vstv %s180
    %v182 = vadd.f32 %v179, %v181
    %s183 = scalar_lea.vmem [#allocation9], 5
    %184 = vst.msk [vmem:[%s183] ss:$8 sm:$0x3] %vm78, %v182
    %185 = vst.msk [vmem:[%s183] ss:$8 sm:$0x0] %vm78, %v182
    %s186 = scalar_lea.vmem [#allocation8], 4
    %v187 = vld [vmem:[%s186] ss:$8 sm:$0x3]
    %s188 = scalar_lea.vmem [#allocation8], 5
    %v189 = vld [vmem:[%s188] ss:$8 sm:$0x3]
    %s190 = scalar_lea.vmem [#allocation8], 6
    %v191 = vld [vmem:[%s190] ss:$8 sm:$0x3]
    %s192 = scalar_lea.vmem [#allocation8], 7
    %v193 = vld [vmem:[%s192] ss:$8 sm:$0x3]
    %s194 = sld [smem:[#allocation2]]
    %v195 = vstv %s194
    %v196 = vmul.f32 %v195, %v187
    %s197 = sld [smem:[#allocation2 + $0x80]]
    %v198 = vstv %s197
    %v199 = vmul.f32 %v198, %v189
    %v200 = vadd.f32 %v196, %v199
    %s201 = sld [smem:[#allocation2 + $0x100]]
    %v202 = vstv %s201
    %v203 = vmul.f32 %v202, %v191
    %v204 = vadd.f32 %v200, %v203
    %s205 = sld [smem:[#allocation2 + $0x180]]
    %v206 = vstv %s205
    %v207 = vmul.f32 %v206, %v193
    %v208 = vadd.f32 %v204, %v207
    %s209 = sld [smem:[#allocation7]]
    %v210 = vstv %s209
    %v211 = vadd.f32 %v208, %v210
    %s212 = scalar_lea.vmem [#allocation9], 6
    %213 = vst.msk [vmem:[%s212] ss:$8 sm:$0x3] %vm78, %v211
    %214 = vst.msk [vmem:[%s212] ss:$8 sm:$0x0] %vm78, %v211
    %s215 = sld [smem:[#allocation2 + $0x1]]
    %v216 = vstv %s215
    %v217 = vmul.f32 %v216, %v187
    %s218 = sld [smem:[#allocation2 + $0x81]]
    %v219 = vstv %s218
    %v220 = vmul.f32 %v219, %v189
    %v221 = vadd.f32 %v217, %v220
    %s222 = sld [smem:[#allocation2 + $0x101]]
    %v223 = vstv %s222
    %v224 = vmul.f32 %v223, %v191
    %v225 = vadd.f32 %v221, %v224
    %s226 = sld [smem:[#allocation2 + $0x181]]
    %v227 = vstv %s226
    %v228 = vmul.f32 %v227, %v193
    %v229 = vadd.f32 %v225, %v228
    %s230 = sld [smem:[#allocation7 + $0x1]]
    %v231 = vstv %s230
    %v232 = vadd.f32 %v229, %v231
    %s233 = scalar_lea.vmem [#allocation9], 7
    %234 = vst.msk [vmem:[%s233] ss:$8 sm:$0x3] %vm78, %v232
    %235 = vst.msk [vmem:[%s233] ss:$8 sm:$0x0] %vm78, %v232
    %s236 = sld [smem:[#allocation2 + $0x2]]
    %v237 = vstv %s236
    %v238 = vmul.f32 %v237, %v187
    %s239 = sld [smem:[#allocation2 + $0x82]]
    %v240 = vstv %s239
    %v241 = vmul.f32 %v240, %v189
    %v242 = vadd.f32 %v238, %v241
    %s243 = sld [smem:[#allocation2 + $0x102]]
    %v244 = vstv %s243
    %v245 = vmul.f32 %v244, %v191
    %v246 = vadd.f32 %v242, %v245
    %s247 = sld [smem:[#allocation2 + $0x182]]
    %v248 = vstv %s247
    %v249 = vmul.f32 %v248, %v193
    %v250 = vadd.f32 %v246, %v249
    %s251 = sld [smem:[#allocation7 + $0x2]]
    %v252 = vstv %s251
    %v253 = vadd.f32 %v250, %v252
    %s254 = scalar_lea.vmem [#allocation9], 16
    %255 = vst.msk [vmem:[%s254] ss:$8 sm:$0x3] %vm78, %v253
    %256 = vst.msk [vmem:[%s254] ss:$8 sm:$0x0] %vm78, %v253
    %s257 = sld [smem:[#allocation2 + $0x3]]
    %v258 = vstv %s257
    %v259 = vmul.f32 %v258, %v187
    %s260 = sld [smem:[#allocation2 + $0x83]]
    %v261 = vstv %s260
    %v262 = vmul.f32 %v261, %v189
    %v263 = vadd.f32 %v259, %v262
    %s264 = sld [smem:[#allocation2 + $0x103]]
    %v265 = vstv %s264
    %v266 = vmul.f32 %v265, %v191
    %v267 = vadd.f32 %v263, %v266
    %s268 = sld [smem:[#allocation2 + $0x183]]
    %v269 = vstv %s268
    %v270 = vmul.f32 %v269, %v193
    %v271 = vadd.f32 %v267, %v270
    %s272 = sld [smem:[#allocation7 + $0x3]]
    %v273 = vstv %s272
    %v274 = vadd.f32 %v271, %v273
    %s275 = scalar_lea.vmem [#allocation9], 17
    %276 = vst.msk [vmem:[%s275] ss:$8 sm:$0x3] %vm78, %v274
    %277 = vst.msk [vmem:[%s275] ss:$8 sm:$0x0] %vm78, %v274
    %s278 = sld [smem:[#allocation2 + $0x4]]
    %v279 = vstv %s278
    %v280 = vmul.f32 %v279, %v187
    %s281 = sld [smem:[#allocation2 + $0x84]]
    %v282 = vstv %s281
    %v283 = vmul.f32 %v282, %v189
    %v284 = vadd.f32 %v280, %v283
    %s285 = sld [smem:[#allocation2 + $0x104]]
    %v286 = vstv %s285
    %v287 = vmul.f32 %v286, %v191
    %v288 = vadd.f32 %v284, %v287
    %s289 = sld [smem:[#allocation2 + $0x184]]
    %v290 = vstv %s289
    %v291 = vmul.f32 %v290, %v193
    %v292 = vadd.f32 %v288, %v291
    %s293 = sld [smem:[#allocation7 + $0x4]]
    %v294 = vstv %s293
    %v295 = vadd.f32 %v292, %v294
    %s296 = scalar_lea.vmem [#allocation9], 18
    %297 = vst.msk [vmem:[%s296] ss:$8 sm:$0x3] %vm78, %v295
    %298 = vst.msk [vmem:[%s296] ss:$8 sm:$0x0] %vm78, %v295
    %s299 = sld [smem:[#allocation2 + $0x5]]
    %v300 = vstv %s299
    %v301 = vmul.f32 %v300, %v187
    %s302 = sld [smem:[#allocation2 + $0x85]]
    %v303 = vstv %s302
    %v304 = vmul.f32 %v303, %v189
    %v305 = vadd.f32 %v301, %v304
    %s306 = sld [smem:[#allocation2 + $0x105]]
    %v307 = vstv %s306
    %v308 = vmul.f32 %v307, %v191
    %v309 = vadd.f32 %v305, %v308
    %s310 = sld [smem:[#allocation2 + $0x185]]
    %v311 = vstv %s310
    %v312 = vmul.f32 %v311, %v193
    %v313 = vadd.f32 %v309, %v312
    %s314 = sld [smem:[#allocation7 + $0x5]]
    %v315 = vstv %s314
    %v316 = vadd.f32 %v313, %v315
    %s317 = scalar_lea.vmem [#allocation9], 19
    %318 = vst.msk [vmem:[%s317] ss:$8 sm:$0x3] %vm78, %v316
    %319 = vst.msk [vmem:[%s317] ss:$8 sm:$0x0] %vm78, %v316
    // Predicated region
    $region26: #{tpu_custom_call.1} parent=1 // pred_check
      _
    $region27: #{tpu_custom_call.1} parent=1 // pred_check_branch
      %321 = sbr.rel (0) target = $region29
    $region28: #{tpu_custom_call.1} parent=1 // pred_region
      %s323 = ssub.s32 512, 512
      %324 = vsyncadd [#allocation4], %s323
      %s325 = sshll.u32 [#allocation9], 4
      %s326 = int_to_ptr.vmem [resolvable:$true] %s325
      %331 = dma.vmem_to_hbm [thread:$0]  %s326, 512, %s3, [#allocation4], 256, 256, 16
    $region29: #{tpu_custom_call.1} parent=1 // pred_fallthru
      _
    // Predicated region
    $region30: #{tpu_custom_call.1} parent=1 // pred_check
      _
    $region31: #{tpu_custom_call.1} parent=1 // pred_check_branch
      %333 = sbr.rel (0) target = $region33
    $region32: #{tpu_custom_call.1} parent=1 // pred_region
      %334 = dma.done [#allocation4], 512
    $region33: #{tpu_custom_call.1} parent=1 // pred_fallthru
      _
    %335 = vsyncpa [#allocation3], 1
    %336 = vsyncpa [#allocation4], 1
    %337 = vsyncpa [#allocation5], 1
    %338 = vsyncpa [#allocation6], 1

</llo_original>
